<compile_context>
chip_gen: v5e
topology: v5e:2x2
jax: 0.10.0
libtpu: 0.0.40
codegen_flags: <defaults>
</compile_context>

<pallas_src>
import functools

import jax
import jax.numpy as jnp
from jax import lax
from jax.experimental import pallas as pl
from jax.experimental.pallas import tpu as pltpu


def _ce_act_kernel(logits_ref, label_ref, out_ref, m_ref, z_ref, t_ref, *,
                   n_total, c_total, tile_n, tile_c, col_mask):
    """One (tile_n, tile_c) slab: online logsumexp over the class axis."""
    i = pl.program_id(0)                      # batch tile  ("parallel")
    k = pl.program_id(1)                      # class tile  ("arbitrary")

    @pl.when(k == 0)
    def _init():
        m_ref[...] = jnp.full_like(m_ref, -jnp.inf)
        z_ref[...] = jnp.zeros_like(z_ref)
        t_ref[...] = jnp.zeros_like(t_ref)

    x = logits_ref[...]                       # (tile_n, tile_c), native dtype
    labels = label_ref[...]                   # (tile_n, 1) int32

    col = k * tile_c + lax.broadcasted_iota(jnp.int32, (tile_n, tile_c), 1)
    if col_mask:  # static: only emitted when the last class tile is padded
        x = jnp.where(col < c_total, x, jnp.asarray(-1e30, x.dtype))

    # Max and one-hot label gather in the native dtype (exact for max/select).
    # TODO(synk): add pl.debug_check for out-of-range labels (PyTorch errors).
    t_tile = jnp.sum(jnp.where(col == labels, x, jnp.asarray(0, x.dtype)),
                     axis=1, keepdims=True).astype(jnp.float32)
    m_tile = jnp.max(x, axis=1, keepdims=True).astype(jnp.float32)

    m_old = m_ref[...]
    m_new = jnp.maximum(m_old, m_tile)
    # f32 only inside the exp / sum-exp path.
    z_tile = jnp.sum(jnp.exp(x.astype(jnp.float32) - m_new),
                     axis=1, keepdims=True)
    z_ref[...] = z_ref[...] * jnp.exp(m_old - m_new) + z_tile
    m_ref[...] = m_new
    t_ref[...] = t_ref[...] + t_tile

    @pl.when(k == pl.num_programs(1) - 1)
    def _finalize():
        # row_loss = -(x_true - m - log(sum exp(x - m)))   (logsumexp form)
        row_loss = -(t_ref[...] - m_ref[...] - jnp.log(z_ref[...]))
        row_idx = i * tile_n + lax.broadcasted_iota(jnp.int32, (tile_n, 1), 0)
        part = jnp.sum(jnp.where(row_idx < n_total, row_loss, jnp.float32(0.0)))
        out_ref[...] = jnp.full(out_ref.shape, part, dtype=out_ref.dtype)


def _vmem_limit_bytes():
    try:
        cap = pltpu.get_tpu_info().vmem_capacity_bytes
    except Exception:
        cap = 64 * 1024 * 1024            # conservative (v7x per-TC physical)
    # ≈96 MiB on v5e/v6e (128 MiB physical), ≈48 MiB on v7x (64 MiB physical).
    return int(min(cap * 3 // 4, 96 * 1024 * 1024))


def _choose_tiles(n, c, itemsize, granule, budget):
    """Pick (tile_n, tile_c) so blocks + f32 temporaries fit the VMEM budget."""
    n_pad = -(-n // granule) * granule
    per_elem = 2 * itemsize + 4 * 4       # 2x dbuf input + ~4 f32-slab temps
    per_row = 5 * 512                     # label dbuf (2) + f32 scratch (3), lane-padded

    rows_full_c = budget // (per_elem * c + per_row)
    if rows_full_c >= granule:
        # Whole class dim per step; aim for >=16 MiB of logits traffic / step.
        tile_c = c
        rows_target = max(granule, (16 * 1024 * 1024) // max(c * itemsize, 1))
        tile_n = min(rows_full_c, rows_target, 2048, n_pad)
        tile_n = max(granule, (tile_n // granule) * granule)
    else:
        # Vocab-scale C: also tile the class dim (online logsumexp path).
        tile_n = min(n_pad, 8 * granule)
        cols = (budget - tile_n * per_row) // (per_elem * tile_n)
        tile_c = max(128, (cols // 128) * 128)
        if tile_c >= c:
            tile_c = c
    return int(tile_n), int(tile_c)


def cross_entropy_loss_act(fc_out, label, *, tile_n=None, tile_c=None):
    """fc_out: (N, C) float (f32/bf16); label: (N,) int.  Returns scalar f32 loss."""
    n, c = fc_out.shape
    itemsize = jnp.dtype(fc_out.dtype).itemsize
    granule = max(8, 32 // itemsize)      # sublane granule: 8 f32 / 16 bf16 / 32 i8
    vmem_limit = _vmem_limit_bytes()
    auto_n, auto_c = _choose_tiles(n, c, itemsize, granule, int(vmem_limit * 0.8))
    tile_n = auto_n if tile_n is None else tile_n
    tile_c = auto_c if tile_c is None else tile_c
    assert tile_n % granule == 0, (tile_n, granule)
    assert tile_c == c or tile_c % 128 == 0, (tile_c, c)

    num_n = pl.cdiv(n, tile_n)
    num_c = pl.cdiv(c, tile_c)
    col_mask = (c % tile_c) != 0          # last class tile is padded

    label2d = label.astype(jnp.int32).reshape(n, 1)
    kernel = functools.partial(_ce_act_kernel, n_total=n, c_total=c,
                               tile_n=tile_n, tile_c=tile_c, col_mask=col_mask)

    partials = pl.pallas_call(
        kernel,
        out_shape=jax.ShapeDtypeStruct((num_n, 8, 128), jnp.float32),
        grid_spec=pltpu.PrefetchScalarGridSpec(
            num_scalar_prefetch=0,
            grid=(num_n, num_c),
            in_specs=[
                pl.BlockSpec((tile_n, tile_c), lambda i, k: (i, k)),
                pl.BlockSpec((tile_n, 1), lambda i, k: (i, 0)),
            ],
            out_specs=pl.BlockSpec((1, 8, 128), lambda i, k: (i, 0, 0)),
            scratch_shapes=[pltpu.VMEM((tile_n, 1), jnp.float32)] * 3,
        ),
        compiler_params=pltpu.CompilerParams(
            dimension_semantics=("parallel", "arbitrary"),
            vmem_limit_bytes=vmem_limit,
        ),
    )(fc_out, label2d)

    # Tiny XLA epilogue: pairwise-sum the per-tile partials, divide by N.
    return jnp.sum(partials[:, 0, 0]) / jnp.float32(n)


def _reference(fc_out, label):
    # Pure-JAX mirror of the PyTorch forward.
    one_hot = jax.nn.one_hot(label, fc_out.shape[1], dtype=jnp.float32)
    p = jax.nn.softmax(fc_out.astype(jnp.float32), axis=1)
    return -(jnp.sum(jnp.log(jnp.sum(one_hot * p, axis=1))) / fc_out.shape[0])


if __name__ == "__main__":
    key = jax.random.PRNGKey(0)
    k1, k2, k3, k4, k5, k6, k7, k8 = jax.random.split(key, 8)

    # Case 1: small, single tile, auto tile sizes.
    N1, C1 = 8, 32
    fc1 = jax.random.normal(k1, (N1, C1), dtype=jnp.float32)
    lb1 = jax.random.randint(k2, (N1,), 0, C1, dtype=jnp.int32)
    loss1 = cross_entropy_loss_act(fc1, lb1)
    jax.block_until_ready(loss1)
    assert jnp.allclose(loss1, _reference(fc1, lb1), rtol=2e-5, atol=2e-5)

    # Case 2: several batch tiles + partial tail tile (row masking).
    N2, C2 = 20, 160
    fc2 = jax.random.normal(k3, (N2, C2), dtype=jnp.float32)
    lb2 = jax.random.randint(k4, (N2,), 0, C2, dtype=jnp.int32)
    loss2 = cross_entropy_loss_act(fc2, lb2, tile_n=8)
    jax.block_until_ready(loss2)
    assert jnp.allclose(loss2, _reference(fc2, lb2), rtol=2e-5, atol=2e-5)

    # Case 3: class-axis tiling with a padded last class tile (online LSE + col mask).
    N3, C3 = 24, 320
    fc3 = jax.random.normal(k5, (N3, C3), dtype=jnp.float32)
    lb3 = jax.random.randint(k6, (N3,), 0, C3, dtype=jnp.int32)
    loss3 = cross_entropy_loss_act(fc3, lb3, tile_n=8, tile_c=128)
    jax.block_until_ready(loss3)
    assert jnp.allclose(loss3, _reference(fc3, lb3), rtol=2e-5, atol=2e-5)

    # Case 4: bf16 logits (16-row sublane granule), two class tiles, no col mask.
    N4, C4 = 32, 256
    fc4 = jax.random.normal(k7, (N4, C4), dtype=jnp.float32).astype(jnp.bfloat16)
    lb4 = jax.random.randint(k8, (N4,), 0, C4, dtype=jnp.int32)
    loss4 = cross_entropy_loss_act(fc4, lb4, tile_n=16, tile_c=128)
    jax.block_until_ready(loss4)
    assert jnp.allclose(loss4, _reference(fc4, lb4), rtol=2e-5, atol=2e-5)

    print("KERNEL_OK")
</pallas_src>

<mosaic_0001>
module attributes {stable_mosaic.version = 11 : i64} {
  func.func @_ce_act_kernel(%arg0: i32, %arg1: i32, %arg2: memref<8x32xf32, #tpu.memory_space<vmem>>, %arg3: memref<8x1xi32, #tpu.memory_space<vmem>>, %arg4: memref<1x8x128xf32, #tpu.memory_space<vmem>>, %arg5: memref<8x1xf32, #tpu.memory_space<vmem>>, %arg6: memref<8x1xf32, #tpu.memory_space<vmem>>, %arg7: memref<8x1xf32, #tpu.memory_space<vmem>>) attributes {dimension_semantics = [#tpu.dimension_semantics<parallel>, #tpu.dimension_semantics<arbitrary>], iteration_bounds = array<i64: 1, 1>, scalar_prefetch = 0 : i64, scratch_operands = 3 : i64, tpu.core_type = #tpu.core_type<tc>, window_params = [{transform_indices = @transform_0, window_bounds = array<i64: 8, 32>}, {transform_indices = @transform_1, window_bounds = array<i64: 8, 1>}, {transform_indices = @transform_2, window_bounds = array<i64: 1, 8, 128>}]} {
    %c0_i32 = arith.constant 0 : i32
    %0 = arith.cmpi eq, %arg1, %c0_i32 : i32
    %1 = arith.extui %0 : i1 to i32
    %c0_i32_0 = arith.constant 0 : i32
    %2 = arith.cmpi ne, %1, %c0_i32_0 : i32
    scf.if %2 {
      %cst_21 = arith.constant 0xFF800000 : f32
      %37 = vector.broadcast %cst_21 : f32 to vector<8x1xf32>
      %c0_22 = arith.constant 0 : index
      %c0_23 = arith.constant 0 : index
      %38 = vector.load %arg5[%c0_22, %c0_23] : memref<8x1xf32, #tpu.memory_space<vmem>>, vector<8x1xf32>
      tpu.vector_store %arg5[%c0_22, %c0_23], %37 {strides = array<i32>} : memref<8x1xf32, #tpu.memory_space<vmem>>, vector<8x1xf32>,
      %cst_24 = arith.constant 0.000000e+00 : f32
      %39 = vector.broadcast %cst_24 : f32 to vector<8x1xf32>
      %c0_25 = arith.constant 0 : index
      %c0_26 = arith.constant 0 : index
      %40 = vector.load %arg6[%c0_25, %c0_26] : memref<8x1xf32, #tpu.memory_space<vmem>>, vector<8x1xf32>
      tpu.vector_store %arg6[%c0_25, %c0_26], %39 {strides = array<i32>} : memref<8x1xf32, #tpu.memory_space<vmem>>, vector<8x1xf32>,
      %cst_27 = arith.constant 0.000000e+00 : f32
      %41 = vector.broadcast %cst_27 : f32 to vector<8x1xf32>
      %c0_28 = arith.constant 0 : index
      %c0_29 = arith.constant 0 : index
      %42 = vector.load %arg7[%c0_28, %c0_29] : memref<8x1xf32, #tpu.memory_space<vmem>>, vector<8x1xf32>
      tpu.vector_store %arg7[%c0_28, %c0_29], %41 {strides = array<i32>} : memref<8x1xf32, #tpu.memory_space<vmem>>, vector<8x1xf32>,
    } else {
    }
    %c0 = arith.constant 0 : index
    %c0_1 = arith.constant 0 : index
    %3 = vector.load %arg2[%c0, %c0_1] : memref<8x32xf32, #tpu.memory_space<vmem>>, vector<8x32xf32>
    %c0_2 = arith.constant 0 : index
    %c0_3 = arith.constant 0 : index
    %4 = vector.load %arg3[%c0_2, %c0_3] : memref<8x1xi32, #tpu.memory_space<vmem>>, vector<8x1xi32>
    %c32_i32 = arith.constant 32 : i32
    %5 = arith.muli %arg1, %c32_i32 : i32
    %6 = tpu.iota {dimensions = array<i32: 1>} : vector<8x32xi32>
    %7 = vector.broadcast %5 : i32 to vector<8x32xi32>
    %8 = arith.addi %7, %6 : vector<8x32xi32>
    %9 = vector.broadcast %4 : vector<8x1xi32> to vector<8x32xi32>
    %10 = arith.cmpi eq, %8, %9 : vector<8x32xi32>
    %cst = arith.constant 0.000000e+00 : f32
    %11 = vector.broadcast %cst : f32 to vector<8x32xf32>
    %12 = arith.select %10, %3, %11 : vector<8x32xi1>, vector<8x32xf32>
    %cst_4 = arith.constant dense<0.000000e+00> : vector<8xf32>
    %13 = vector.multi_reduction <add>, %12, %cst_4 [1] : vector<8x32xf32> to vector<8xf32>
    %14 = vector.shape_cast %13 : vector<8xf32> to vector<8x1xf32>
    %cst_5 = arith.constant dense<0xFF800000> : vector<8xf32>
    %15 = vector.multi_reduction <maximumf>, %3, %cst_5 [1] : vector<8x32xf32> to vector<8xf32>
    %16 = vector.shape_cast %15 : vector<8xf32> to vector<8x1xf32>
    %c0_6 = arith.constant 0 : index
    %c0_7 = arith.constant 0 : index
    %17 = vector.load %arg5[%c0_6, %c0_7] : memref<8x1xf32, #tpu.memory_space<vmem>>, vector<8x1xf32>
    %18 = arith.maximumf %17, %16 : vector<8x1xf32>
    %19 = vector.broadcast %18 : vector<8x1xf32> to vector<8x32xf32>
    %20 = arith.subf %3, %19 : vector<8x32xf32>
    %21 = math.exp %20 : vector<8x32xf32>
    %cst_8 = arith.constant dense<0.000000e+00> : vector<8xf32>
    %22 = vector.multi_reduction <add>, %21, %cst_8 [1] : vector<8x32xf32> to vector<8xf32>
    %23 = vector.shape_cast %22 : vector<8xf32> to vector<8x1xf32>
    %c0_9 = arith.constant 0 : index
    %c0_10 = arith.constant 0 : index
    %24 = vector.load %arg6[%c0_9, %c0_10] : memref<8x1xf32, #tpu.memory_space<vmem>>, vector<8x1xf32>
    %25 = arith.subf %17, %18 : vector<8x1xf32>
    %26 = math.exp %25 : vector<8x1xf32>
    %27 = arith.mulf %24, %26 : vector<8x1xf32>
    %28 = arith.addf %27, %23 : vector<8x1xf32>
    %c0_11 = arith.constant 0 : index
    %c0_12 = arith.constant 0 : index
    %29 = vector.load %arg6[%c0_11, %c0_12] : memref<8x1xf32, #tpu.memory_space<vmem>>, vector<8x1xf32>
    tpu.vector_store %arg6[%c0_11, %c0_12], %28 {strides = array<i32>} : memref<8x1xf32, #tpu.memory_space<vmem>>, vector<8x1xf32>,
    %c0_13 = arith.constant 0 : index
    %c0_14 = arith.constant 0 : index
    %30 = vector.load %arg5[%c0_13, %c0_14] : memref<8x1xf32, #tpu.memory_space<vmem>>, vector<8x1xf32>
    tpu.vector_store %arg5[%c0_13, %c0_14], %18 {strides = array<i32>} : memref<8x1xf32, #tpu.memory_space<vmem>>, vector<8x1xf32>,
    %c0_15 = arith.constant 0 : index
    %c0_16 = arith.constant 0 : index
    %31 = vector.load %arg7[%c0_15, %c0_16] : memref<8x1xf32, #tpu.memory_space<vmem>>, vector<8x1xf32>
    %32 = arith.addf %31, %14 : vector<8x1xf32>
    %c0_17 = arith.constant 0 : index
    %c0_18 = arith.constant 0 : index
    %33 = vector.load %arg7[%c0_17, %c0_18] : memref<8x1xf32, #tpu.memory_space<vmem>>, vector<8x1xf32>
    tpu.vector_store %arg7[%c0_17, %c0_18], %32 {strides = array<i32>} : memref<8x1xf32, #tpu.memory_space<vmem>>, vector<8x1xf32>,
    %c0_i32_19 = arith.constant 0 : i32
    %34 = arith.cmpi eq, %arg1, %c0_i32_19 : i32
    %35 = arith.extui %34 : i1 to i32
    %c0_i32_20 = arith.constant 0 : i32
    %36 = arith.cmpi ne, %35, %c0_i32_20 : i32
    scf.if %36 {
      %c0_21 = arith.constant 0 : index
      %c0_22 = arith.constant 0 : index
      %37 = vector.load %arg7[%c0_21, %c0_22] : memref<8x1xf32, #tpu.memory_space<vmem>>, vector<8x1xf32>
      %c0_23 = arith.constant 0 : index
      %c0_24 = arith.constant 0 : index
      %38 = vector.load %arg5[%c0_23, %c0_24] : memref<8x1xf32, #tpu.memory_space<vmem>>, vector<8x1xf32>
      %39 = arith.subf %37, %38 : vector<8x1xf32>
      %c0_25 = arith.constant 0 : index
      %c0_26 = arith.constant 0 : index
      %40 = vector.load %arg6[%c0_25, %c0_26] : memref<8x1xf32, #tpu.memory_space<vmem>>, vector<8x1xf32>
      %41 = math.log %40 : vector<8x1xf32>
      %42 = arith.subf %39, %41 : vector<8x1xf32>
      %cst_27 = arith.constant 0.000000e+00 : f32
      %43 = vector.broadcast %cst_27 : f32 to vector<8x1xf32>
      %44 = arith.subf %43, %42 : vector<8x1xf32>
      %c8_i32 = arith.constant 8 : i32
      %45 = arith.muli %arg0, %c8_i32 : i32
      %46 = tpu.iota {dimensions = array<i32: 0>} : vector<8x1xi32>
      %47 = vector.broadcast %45 : i32 to vector<8x1xi32>
      %48 = arith.addi %47, %46 : vector<8x1xi32>
      %c8_i32_28 = arith.constant 8 : i32
      %49 = vector.broadcast %c8_i32_28 : i32 to vector<8x1xi32>
      %50 = arith.cmpi slt, %48, %49 : vector<8x1xi32>
      %cst_29 = arith.constant 0.000000e+00 : f32
      %51 = vector.broadcast %cst_29 : f32 to vector<8x1xf32>
      %52 = arith.select %50, %44, %51 : vector<8x1xi1>, vector<8x1xf32>
      %53 = vector.shape_cast %52 : vector<8x1xf32> to vector<1x8x1xf32>
      %cst_30 = arith.constant dense<0.000000e+00> : vector<1xf32>
      %54 = vector.multi_reduction <add>, %53, %cst_30 [1, 2] : vector<1x8x1xf32> to vector<1xf32>
      %55 = vector.shape_cast %54 : vector<1xf32> to vector<1x1x1xf32>
      %56 = vector.extract %55[0, 0, 0] : f32 from vector<1x1x1xf32>
      %57 = vector.broadcast %56 : f32 to vector<1x8x128xf32>
      %c0_31 = arith.constant 0 : index
      %c0_32 = arith.constant 0 : index
      %c0_33 = arith.constant 0 : index
      %58 = vector.load %arg4[%c0_31, %c0_32, %c0_33] : memref<1x8x128xf32, #tpu.memory_space<vmem>>, vector<1x8x128xf32>
      tpu.vector_store %arg4[%c0_31, %c0_32, %c0_33], %57 {strides = array<i32>} : memref<1x8x128xf32, #tpu.memory_space<vmem>>, vector<1x8x128xf32>,
    } else {
    }
    return
  }
  func.func @transform_0(%arg0: i32, %arg1: i32) -> (i32, i32) {
    %c0_i32 = arith.constant 0 : i32
    return %arg0, %arg1 : i32, i32
  }
  func.func @transform_1(%arg0: i32, %arg1: i32) -> (i32, i32) {
    %c0_i32 = arith.constant 0 : i32
    %c0_i32_0 = arith.constant 0 : i32
    return %arg0, %c0_i32 : i32, i32
  }
  func.func @transform_2(%arg0: i32, %arg1: i32) -> (i32, i32, i32) {
    %c0_i32 = arith.constant 0 : i32
    %c0_i32_0 = arith.constant 0 : i32
    %c0_i32_1 = arith.constant 0 : i32
    return %arg0, %c0_i32, %c0_i32_0 : i32, i32, i32
  }
}

</mosaic_0001>

<llo_original>
// kernel: tpu_custom_call.1
$region0: #{tpu_custom_call.1}
  #allocation0 [shape = 'u32[]', space=smem, size = 0x4, offset = 0x4, fixed_abs, tag = 'smem constant byte address 0x4 - core index']
  #allocation1 [shape = 'u32[72,128]{1,0:T(1,128)}', space=vmem, size = 0x9000, scoped, tag = 'internal scratch']
  #allocation2 [shape = 'f32[8,1]{1,0:T(8,128)}', space=vmem, size = 0x1000, scoped, tag = 'scratch operand']
  #allocation3 [shape = 'f32[8,1]{1,0:T(8,128)}', space=vmem, size = 0x1000, scoped, tag = 'scratch operand']
  #allocation4 [shape = 'f32[8,1]{1,0:T(8,128)}', space=vmem, size = 0x1000, scoped, tag = 'scratch operand']
  %s0 = inlined_call_operand.vmem [shape: f32[8,32], index: 0, kind: input, shape index: {}]
  %s1 = inlined_call_operand.vmem [shape: s32[8,1], index: 1, kind: input, shape index: {}]
  %s2 = inlined_call_operand.hbm [shape: f32[1,8,128], index: 2, kind: output, shape index: {}]
  %s3 = sld [smem:[#allocation0]]
  $region26: #{tpu_custom_call.1} parent=0
    _
  %s5 = ssub.s32 1, %s3
  %s6 = scalar_select 0, %s5, %s3
  $region1: #{tpu_custom_call.1} parent=0
    #allocation5 [shape = 'u8[4096]{0}', space=vmem, size = 0x1000, scoped, tag = 'output window, operand 0, single buffered']
    #allocation6 [shape = 's32[1]{0}', space=sflag, size = 0x4, scoped, tag = 'scoped memory for tpu_custom_call.1']
    %7 = vsyncpa [#allocation6], 0
    // Predicated region
    $region2: #{tpu_custom_call.1} parent=1 // pred_check
      _
    $region3: #{tpu_custom_call.1} parent=1 // pred_check_branch
      %9 = sbr.rel (0) target = $region5
    $region4: #{tpu_custom_call.1} parent=1 // pred_region
      _
    $region5: #{tpu_custom_call.1} parent=1 // pred_fallthru
      _
    // Predicated region
    $region6: #{tpu_custom_call.1} parent=1 // pred_check
      _
    $region7: #{tpu_custom_call.1} parent=1 // pred_check_branch
      %11 = sbr.rel (0) target = $region9
    $region8: #{tpu_custom_call.1} parent=1 // pred_region
      _
    $region9: #{tpu_custom_call.1} parent=1 // pred_fallthru
      _
    %p12 = scmp.eq.s32.totalorder 0, 0
    // Predicated region
    $region10: #{tpu_custom_call.1} parent=1 // pred_check
      %p13 = pneg %p12
    $region11: #{tpu_custom_call.1} parent=1 // pred_check_branch
      %15 = sbr.rel (%p13) target = $region13
    $region12: #{tpu_custom_call.1} parent=1 // pred_region
      %vm16 = vcmask 7168
      %17 = vst.msk [vmem:[#allocation2] sm:$0xff] %vm16, -inf
      %18 = vst.msk [vmem:[#allocation3] sm:$0xff] %vm16, 0.0
      %19 = vst.msk [vmem:[#allocation4] sm:$0xff] %vm16, 0.0
    $region13: #{tpu_custom_call.1} parent=1 // pred_fallthru
      _
    %v20 = vld [vmem:[%s0] sm:$0xff]
    %v21 = vld [vmem:[%s1] sm:$0xff]
    %s22 = smul.u32 0, 32
    %v23 = vlaneseq
    %v24 = vand.u32 %v23, 127
    %v25 = vstv %s22
    %v26 = vadd.s32 %v25, %v24
    %27 = vset.pattern.permute.xlu0 0
    %28 = vperm.xlu0 %27, %v21
    %v29 = vpop.permute.xlu0 %28
    %vm30 = vcmp.eq.s32.totalorder %v26, %v29
    %v31 = vsel %vm30, %v20, 0.0
    %vm32 = vcmask 261120
    %v33 = vsel %vm32, %v31, 0.0
    %34 = vadd.xlane.f32.xlu0 %v33
    %v35 = vpop.xlane.xlu0 %34
    %v36 = vsel %vm32, %v20, -inf
    %37 = vmax.xlane.f32.xlu0 %v36
    %v38 = vpop.xlane.xlu0 %37
    %v39 = vld [vmem:[#allocation2] sm:$0xff]
    %v40 = vmax.f32 %v39, %v38
    %42 = vset.pattern.permute.xlu0 0
    %43 = vperm.xlu0 %42, %v40
    %v44 = vpop.permute.xlu0 %43
    %v46 = vsub.f32 %v20, %v44
    %v47 = vmul.f32 %v46, 1.442695
    %v48 = vpow.pop %v47
    %v49 = vsel %vm32, %v48, 0.0
    %50 = vadd.xlane.f32.xlu0 %v49
    %v51 = vpop.xlane.xlu0 %50
    %v52 = vld [vmem:[#allocation3] sm:$0xff]
    %v53 = vsub.f32 %v39, %v40
    %v54 = vmul.f32 %v53, 1.442695
    %v55 = vpow.pop %v54
    %v56 = vmul.f32 %v52, %v55
    %v57 = vadd.f32 %v56, %v51
    %vm58 = vcmask 7168
    %59 = vst.msk [vmem:[#allocation3] sm:$0xff] %vm58, %v57
    %60 = vst.msk [vmem:[#allocation2] sm:$0xff] %vm58, %v40
    %v61 = vld [vmem:[#allocation4] sm:$0xff]
    %v62 = vadd.f32 %v61, %v35
    %63 = vst.msk [vmem:[#allocation4] sm:$0xff] %vm58, %v62
    // Predicated region
    $region14: #{tpu_custom_call.1} parent=1 // pred_check
      %p64 = pneg %p12
    $region15: #{tpu_custom_call.1} parent=1 // pred_check_branch
      %66 = sbr.rel (%p64) target = $region17
    $region16: #{tpu_custom_call.1} parent=1 // pred_region
      %v67 = vld [vmem:[#allocation4] sm:$0xff]
      %v68 = vld [vmem:[#allocation2] sm:$0xff]
      %v69 = vsub.f32 %v67, %v68
      %v70 = vld [vmem:[#allocation3] sm:$0xff]
      %v71 = vlog2.pop %v70
      %v72 = vmul.f32 %v71, 0.6931472
      %v73 = vsub.f32 %v69, %v72
      %v74 = vsub.f32 0.0, %v73
      %s75 = smul.u32 0, 8
      %v76 = vlaneseq
      %v77 = vshrl.u32 %v76, 7
      %v78 = vstv %s75
      %v79 = vadd.s32 %v78, %v77
      %vm80 = vcmp.lt.s32.totalorder %v79, 8
      %v81 = vsel %vm80, %v74, 0.0
      %v82 = vsel %vm58, %v81, 0.0
      %83 = vadd.xlane.f32.xlu0 %v82
      %v84 = vpop.xlane.xlu0 %83
      %v85 = vrot.slane %v84, 4
      %v86 = vadd.f32 %v84, %v85
      %v87 = vrot.slane %v86, 2
      %v88 = vadd.f32 %v86, %v87
      %v89 = vrot.slane %v88, 1
      %v90 = vadd.f32 %v88, %v89
      %s91 = vtos %v90
      %v92 = vstv %s91
      %93 = vst [vmem:[#allocation5] sm:$0xff] %v92
    $region17: #{tpu_custom_call.1} parent=1 // pred_fallthru
      _
    // Predicated region
    $region18: #{tpu_custom_call.1} parent=1 // pred_check
      _
    $region19: #{tpu_custom_call.1} parent=1 // pred_check_branch
      %95 = sbr.rel (0) target = $region21
    $region20: #{tpu_custom_call.1} parent=1 // pred_region
      %97 = vsyncadd [#allocation6], 0
      %s99 = sshll.u32 [#allocation5], 4
      %s100 = int_to_ptr.vmem [resolvable:$true] %s99
      %s101 = sshll.u32 %s2, 4
      %s102 = int_to_ptr.hbm [resolvable:$true] %s101
      %104 = dma.vmem_to_hbm [thread:$0]  %s100, 128, %s102, [#allocation6]
    $region21: #{tpu_custom_call.1} parent=1 // pred_fallthru
      _
    // Predicated region
    $region22: #{tpu_custom_call.1} parent=1 // pred_check
      _
    $region23: #{tpu_custom_call.1} parent=1 // pred_check_branch
      %106 = sbr.rel (0) target = $region25
    $region24: #{tpu_custom_call.1} parent=1 // pred_region
      %108 = dma.done [#allocation6], 128
    $region25: #{tpu_custom_call.1} parent=1 // pred_fallthru
      _
    %109 = vsyncpa [#allocation6], 1

</llo_original>
